<compile_context>
chip_gen: v7x
topology: tpu7x:2x2x1
jax: 0.10.0
libtpu: 0.0.40
codegen_flags: <defaults>
</compile_context>

<pallas_src>
import functools

import jax
import jax.numpy as jnp
from jax.experimental import pallas as pl
from jax.experimental.pallas import tpu as pltpu


def _round_up(x, m):
    return (x + m - 1) // m * m


def _searchable_block_kernel(x_ref, w_ref, sb_ref, o_ref, slab_ref, *,
                             K, stride, Ws, Cin, Cout, B, LWp, row_blk):
    """One grid step = B images, fully lane-dense, a single MXU matmul.

    x_ref   : (B, s*s, Cin, L)         space-to-depth flattened padded input (compute dtype)
    w_ref   : (Cout+Cin, K*K*row_blk)  [dense im2col ; block-diag depthwise] weights
    sb_ref  : (2, Cout+Cin, 1)         gate-folded BN (scale; bias), f32
    o_ref   : (B, Cout, LWp)           lane-padded output rows (crop happens outside)
    slab_ref: (K*K*row_blk, B*LWp)     im2col slab scratch (compute dtype)
    """
    s = stride
    npad = row_blk - Cin
    zpad = jnp.zeros((npad, LWp), slab_ref.dtype) if npad else None   # hoisted

    # im2col slab fill: per image, per tap, a contiguous lane window of the stride
    # phase plane is stored into an aligned row block.  (The batched matmul below
    # removed all per-image accumulators, so this static unroll keeps no long-lived
    # vregs — each tap value dies at its store.)
    for b in range(B):
        col0 = b * LWp
        planes = {}                                  # lazily-loaded stride phases
        for kh in range(K):
            for kw in range(K):
                r = kh * K + kw
                p = (kh % s) * s + (kw % s)          # stride phase plane
                start = (kh // s) * Ws + (kw // s)   # lane offset of the tap
                if p not in planes:
                    planes[p] = x_ref[b, p]          # (Cin, L) compute dtype
                tap = planes[p][:, start:start + LWp]          # (Cin, LWp)
                if npad:
                    # zero-pad to the sublane packing so the store is tile-aligned
                    tap = jnp.concatenate([tap, zpad], axis=0)
                slab_ref[r * row_blk:(r + 1) * row_blk, col0:col0 + LWp] = tap

    # One MXU matmul per grid step: dense + depthwise branches stacked on the M axis,
    # all packed images stacked on the streaming N axis, f32 accumulation.
    # TODO(synk): for large Cin (dense matmul MXU-bound) fall back to a VPU depthwise.
    y = jnp.dot(w_ref[...], slab_ref[...], preferred_element_type=jnp.float32)
    # Folded BN (+ softmax gate) + ReLU for both branches at once, mix by adding.
    z = jnp.maximum(y * sb_ref[0] + sb_ref[1], 0.0)                  # (Cout+Cin, B*LWp)
    out = z[:Cout] + z[Cout:]                                        # (Cout, B*LWp)
    for b in range(B):
        o_ref[b] = out[:, b * LWp:(b + 1) * LWp]     # lane-dense store (LWp % 128 == 0)


def searchable_block(x_nchw, params, *, kernel_size, stride, padding,
                     compute_dtype=jnp.bfloat16, batch_block=1):
    """SearchableBlock forward.  x_nchw: (N, Cin, H, W) f32 -> (N, Cout, Ho, Wo) f32."""
    N, Cin, H, W = x_nchw.shape
    K, s = kernel_size, stride
    KK = K * K
    Cout = params["w1"].shape[0]
    assert Cin == Cout, "mixing the two branches requires Cin == Cout"
    assert N % batch_block == 0
    B = batch_block

    itemsize = jnp.dtype(compute_dtype).itemsize
    pack = 8 * (4 // itemsize)              # sublane rows per native tile (8 f32, 16 bf16)
    row_blk = _round_up(Cin, pack)          # per-tap slab row block (aligned stores)

    Hp, Wp = H + 2 * padding, W + 2 * padding
    Ho = (Hp - K) // s + 1
    Wo = (Wp - K) // s + 1
    qmax = (K - 1) // s                     # max per-phase tap offset in rows / cols
    Ws = Wo + qmax                          # per-phase plane row width
    LW = Ho * Ws                            # valid flattened output length
    LWp = _round_up(LW, 128)                # lane-dense (128-multiple) output/slab width
    P = s * s
    # plane length: every tap window [start, start+LWp) must stay inside the plane
    Hs = -(-(qmax * Ws + qmax + LWp) // Ws)
    L = Hs * Ws

    # --- layout plumbing (one XLA pass over x; cheap in bf16) ---
    # TODO(synk): for production shapes, fold the pad + space-to-depth into an
    # in-kernel strided DMA (memory_space=pl.ANY) and add a spatial (Ho) grid axis so
    # the slab fits v7x's 64 MiB VMEM.
    xc = x_nchw.astype(compute_dtype)
    xp = jnp.pad(xc, ((0, 0), (0, 0), (padding, padding), (padding, padding)))
    Ht, Wt = Hs * s, Ws * s
    xp = xp[:, :, :Ht, :Wt]                           # crop (only in corner configs)
    xp = jnp.pad(xp, ((0, 0), (0, 0),
                      (0, Ht - xp.shape[2]), (0, Wt - xp.shape[3])))
    # space-to-depth + flatten: (N,C,Hs,s,Ws,s) -> (N, s*s, C, Hs*Ws); identity for s=1.
    xp = xp.reshape(N, Cin, Hs, s, Ws, s)
    xp = jnp.transpose(xp, (0, 3, 5, 1, 2, 4)).reshape(N, P, Cin, L)

    # Weights: [dense im2col ; block-diagonal depthwise] stacked on the output axis,
    # columns in slab row order (tap-major, channel-minor, zero-padded to row_blk).
    w1 = jnp.transpose(params["w1"], (0, 2, 3, 1)).reshape(Cout, KK, Cin)
    w1 = jnp.pad(w1, ((0, 0), (0, 0), (0, row_blk - Cin)))
    w2 = params["w2"][:, 0].reshape(Cin, KK)
    w2 = w2[:, :, None] * jnp.eye(Cin, row_blk, dtype=w2.dtype)[:, None, :]
    w_all = jnp.concatenate([w1, w2], axis=0).reshape(Cout + Cin, KK * row_blk)
    w_all = w_all.astype(compute_dtype)

    # Folded BN with the softmax gate absorbed (gate >= 0, so a*relu(z) == relu(a*z)).
    eps = 1e-5

    def fold_bn(gamma, beta, mean, var):
        sc = gamma / jnp.sqrt(var + eps)
        return jnp.stack([sc, beta - mean * sc], 0).astype(jnp.float32)[:, :, None]

    # TODO(synk): ThermometricModule source not provided; modeled as softmax mixture.
    mix = jax.nn.softmax(params["alpha"].astype(jnp.float32))
    sb = jnp.concatenate(
        [fold_bn(params["bn1_gamma"], params["bn1_beta"],
                 params["bn1_mean"], params["bn1_var"]) * mix[0],
         fold_bn(params["bn2_gamma"], params["bn2_beta"],
                 params["bn2_mean"], params["bn2_var"]) * mix[1]],
        axis=1)                                                   # (2, Cout+Cin, 1)

    kern = functools.partial(_searchable_block_kernel, K=K, stride=s, Ws=Ws,
                             Cin=Cin, Cout=Cout, B=B, LWp=LWp, row_blk=row_blk)

    # Explicit VMEM budget: double-buffered in/out blocks + weights + slab + headroom.
    in_block = B * P * Cin * L * itemsize
    out_block = B * Cout * LWp * 4
    slab_bytes = KK * row_blk * B * LWp * itemsize
    w_bytes = (Cout + Cin) * KK * row_blk * itemsize + 2 * (Cout + Cin) * 4
    vmem_limit = int(min(110 * 2**20,
                         max(2 * (2 * (in_block + out_block + w_bytes) + slab_bytes),
                             8 * 2**20)))

    out = pl.pallas_call(
        kern,
        out_shape=jax.ShapeDtypeStruct((N, Cout, LWp), jnp.float32),
        grid=(N // B,),
        in_specs=[
            pl.BlockSpec((B, P, Cin, L), lambda n: (n, 0, 0, 0)),
            pl.BlockSpec((Cout + Cin, KK * row_blk), lambda n: (0, 0)),
            pl.BlockSpec((2, Cout + Cin, 1), lambda n: (0, 0, 0)),
        ],
        out_specs=pl.BlockSpec((B, Cout, LWp), lambda n: (n, 0, 0)),
        scratch_shapes=[pltpu.VMEM((KK * row_blk, B * LWp), compute_dtype)],
        compiler_params=pltpu.CompilerParams(
            dimension_semantics=("parallel",),   # >=2 steps shard across v7x TCs
            vmem_limit_bytes=vmem_limit),
    )(xp, w_all, sb)

    # TODO(synk): skip this crop pass when the consumer accepts the lane-padded
    # (Cout, Ho, Ws) layout, or emit NCHW via a strided output DMA inside the kernel.
    return out[:, :, :LW].reshape(N, Cout, Ho, Ws)[:, :, :, :Wo]


def reference(x_nchw, params, *, kernel_size, stride, padding):
    """Plain-JAX reference (lax conv) for correctness checking."""
    eps = 1e-5
    Cin = x_nchw.shape[1]
    prec = jax.lax.Precision.HIGHEST

    dn1 = jax.lax.conv_dimension_numbers(x_nchw.shape, params["w1"].shape,
                                         ("NCHW", "OIHW", "NCHW"))
    c1 = jax.lax.conv_general_dilated(x_nchw, params["w1"], (stride, stride),
                                      [(padding, padding)] * 2,
                                      dimension_numbers=dn1, precision=prec)
    s1 = params["bn1_gamma"] / jnp.sqrt(params["bn1_var"] + eps)
    b1 = params["bn1_beta"] - params["bn1_mean"] * s1
    y1 = jnp.maximum(c1 * s1[None, :, None, None] + b1[None, :, None, None], 0.0)

    dn2 = jax.lax.conv_dimension_numbers(x_nchw.shape, params["w2"].shape,
                                         ("NCHW", "OIHW", "NCHW"))
    c2 = jax.lax.conv_general_dilated(x_nchw, params["w2"], (stride, stride),
                                      [(padding, padding)] * 2,
                                      dimension_numbers=dn2,
                                      feature_group_count=Cin, precision=prec)
    s2 = params["bn2_gamma"] / jnp.sqrt(params["bn2_var"] + eps)
    b2 = params["bn2_beta"] - params["bn2_mean"] * s2
    y2 = jnp.maximum(c2 * s2[None, :, None, None] + b2[None, :, None, None], 0.0)

    mix = jax.nn.softmax(params["alpha"])
    return mix[0] * y1 + mix[1] * y2


if __name__ == "__main__":
    N, C, H, W = 2, 8, 16, 16
    K, padding = 3, 1

    key = jax.random.PRNGKey(0)
    ks = jax.random.split(key, 12)

    params = {
        "w1": jax.random.normal(ks[0], (C, C, K, K), jnp.float32)
              * jnp.sqrt(2.0 / (C * K * K)),
        "w2": jax.random.normal(ks[1], (C, 1, K, K), jnp.float32)
              * jnp.sqrt(2.0 / (K * K)),
        "bn1_gamma": 1.0 + 0.1 * jax.random.normal(ks[2], (C,), jnp.float32),
        "bn1_beta": 0.1 * jax.random.normal(ks[3], (C,), jnp.float32),
        "bn1_mean": 0.1 * jax.random.normal(ks[4], (C,), jnp.float32),
        "bn1_var": 1.0 + 0.5 * jax.random.uniform(ks[5], (C,), jnp.float32),
        "bn2_gamma": 1.0 + 0.1 * jax.random.normal(ks[6], (C,), jnp.float32),
        "bn2_beta": 0.1 * jax.random.normal(ks[7], (C,), jnp.float32),
        "bn2_mean": 0.1 * jax.random.normal(ks[8], (C,), jnp.float32),
        "bn2_var": 1.0 + 0.5 * jax.random.uniform(ks[9], (C,), jnp.float32),
        "alpha": jax.random.normal(ks[10], (2,), jnp.float32),
    }
    x = jax.random.normal(ks[11], (N, C, H, W), jnp.float32)

    def round_bf16(a):
        return a.astype(jnp.bfloat16).astype(jnp.float32)

    # 1) Default bf16 MXU path, one image per step (2 grid steps -> both v7x TCs).
    out_bf = searchable_block(x, params, kernel_size=K, stride=1, padding=padding)
    out_bf = jax.block_until_ready(out_bf)
    assert out_bf.shape == (N, C, H, W)
    params_r = dict(params)
    params_r["w1"] = round_bf16(params["w1"])
    params_r["w2"] = round_bf16(params["w2"])
    ref_bf = reference(round_bf16(x), params_r, kernel_size=K, stride=1,
                       padding=padding)
    err_bf = float(jnp.max(jnp.abs(out_bf - ref_bf)))
    assert err_bf < 5e-3, f"bf16 stride-1 mismatch vs rounded reference: {err_bf}"

    # 2) f32 path, both images packed into one grid step (tests the batched matmul).
    out_f32 = searchable_block(x, params, kernel_size=K, stride=1, padding=padding,
                               compute_dtype=jnp.float32, batch_block=2)
    out_f32 = jax.block_until_ready(out_f32)
    ref = reference(x, params, kernel_size=K, stride=1, padding=padding)
    err = float(jnp.max(jnp.abs(out_f32 - ref)))
    assert err < 2e-3, f"f32 stride-1 mismatch vs reference: {err}"

    # 3) stride-2 path (space-to-depth phases), f32.
    out_s2 = searchable_block(x, params, kernel_size=K, stride=2, padding=padding,
                              compute_dtype=jnp.float32, batch_block=1)
    out_s2 = jax.block_until_ready(out_s2)
    ref_s2 = reference(x, params, kernel_size=K, stride=2, padding=padding)
    assert out_s2.shape == ref_s2.shape == (N, C, 8, 8)
    err_s2 = float(jnp.max(jnp.abs(out_s2 - ref_s2)))
    assert err_s2 < 2e-3, f"f32 stride-2 mismatch vs reference: {err_s2}"

    print("KERNEL_OK")
</pallas_src>

<mosaic_0001>
module attributes {stable_mosaic.version = 11 : i64} {
  func.func @_searchable_block_kernel(%arg0: i32, %arg1: memref<1x1x8x432xbf16, #tpu.memory_space<vmem>>, %arg2: memref<16x144xbf16, #tpu.memory_space<vmem>>, %arg3: memref<2x16x1xf32, #tpu.memory_space<vmem>>, %arg4: memref<1x8x384xf32, #tpu.memory_space<vmem>>, %arg5: memref<144x384xbf16, #tpu.memory_space<vmem>>) attributes {dimension_semantics = [#tpu.dimension_semantics<parallel>], iteration_bounds = array<i64: 2>, scalar_prefetch = 0 : i64, scratch_operands = 1 : i64, tpu.core_type = #tpu.core_type<tc>, window_params = [{transform_indices = @transform_0, window_bounds = array<i64: 1, 1, 8, 432>}, {pipeline_mode = #tpu.pipeline_mode<synchronous>, transform_indices = @transform_1, window_bounds = array<i64: 16, 144>}, {pipeline_mode = #tpu.pipeline_mode<synchronous>, transform_indices = @transform_2, window_bounds = array<i64: 2, 16, 1>}, {transform_indices = @transform_3, window_bounds = array<i64: 1, 8, 384>}]} {
    %cst = arith.constant 0.000000e+00 : bf16
    %0 = vector.broadcast %cst : bf16 to vector<8x384xbf16>
    %c0 = arith.constant 0 : index
    %c0_0 = arith.constant 0 : index
    %c0_1 = arith.constant 0 : index
    %c0_2 = arith.constant 0 : index
    %1 = vector.load %arg1[%c0, %c0_0, %c0_1, %c0_2] : memref<1x1x8x432xbf16, #tpu.memory_space<vmem>>, vector<1x1x8x432xbf16>
    %2 = vector.shape_cast %1 : vector<1x1x8x432xbf16> to vector<8x432xbf16>
    %3 = vector.extract_strided_slice %2 {offsets = [0, 0], sizes = [8, 384], strides = [1, 1]} : vector<8x432xbf16> to vector<8x384xbf16>
    %4 = tpu.concatenate %3, %0 in 0 : vector<8x384xbf16>, vector<8x384xbf16> -> vector<16x384xbf16>
    %c0_3 = arith.constant 0 : index
    %c0_4 = arith.constant 0 : index
    %5 = vector.load %arg5[%c0_3, %c0_4] : memref<144x384xbf16, #tpu.memory_space<vmem>>, vector<16x384xbf16>
    tpu.vector_store %arg5[%c0_3, %c0_4], %4 {strides = array<i32>} : memref<144x384xbf16, #tpu.memory_space<vmem>>, vector<16x384xbf16>,
    %6 = vector.extract_strided_slice %2 {offsets = [0, 1], sizes = [8, 384], strides = [1, 1]} : vector<8x432xbf16> to vector<8x384xbf16>
    %7 = tpu.concatenate %6, %0 in 0 : vector<8x384xbf16>, vector<8x384xbf16> -> vector<16x384xbf16>
    %c16 = arith.constant 16 : index
    %c0_5 = arith.constant 0 : index
    %8 = vector.load %arg5[%c16, %c0_5] : memref<144x384xbf16, #tpu.memory_space<vmem>>, vector<16x384xbf16>
    tpu.vector_store %arg5[%c16, %c0_5], %7 {strides = array<i32>} : memref<144x384xbf16, #tpu.memory_space<vmem>>, vector<16x384xbf16>,
    %9 = vector.extract_strided_slice %2 {offsets = [0, 2], sizes = [8, 384], strides = [1, 1]} : vector<8x432xbf16> to vector<8x384xbf16>
    %10 = tpu.concatenate %9, %0 in 0 : vector<8x384xbf16>, vector<8x384xbf16> -> vector<16x384xbf16>
    %c32 = arith.constant 32 : index
    %c0_6 = arith.constant 0 : index
    %11 = vector.load %arg5[%c32, %c0_6] : memref<144x384xbf16, #tpu.memory_space<vmem>>, vector<16x384xbf16>
    tpu.vector_store %arg5[%c32, %c0_6], %10 {strides = array<i32>} : memref<144x384xbf16, #tpu.memory_space<vmem>>, vector<16x384xbf16>,
    %12 = vector.extract_strided_slice %2 {offsets = [0, 18], sizes = [8, 384], strides = [1, 1]} : vector<8x432xbf16> to vector<8x384xbf16>
    %13 = tpu.concatenate %12, %0 in 0 : vector<8x384xbf16>, vector<8x384xbf16> -> vector<16x384xbf16>
    %c48 = arith.constant 48 : index
    %c0_7 = arith.constant 0 : index
    %14 = vector.load %arg5[%c48, %c0_7] : memref<144x384xbf16, #tpu.memory_space<vmem>>, vector<16x384xbf16>
    tpu.vector_store %arg5[%c48, %c0_7], %13 {strides = array<i32>} : memref<144x384xbf16, #tpu.memory_space<vmem>>, vector<16x384xbf16>,
    %15 = vector.extract_strided_slice %2 {offsets = [0, 19], sizes = [8, 384], strides = [1, 1]} : vector<8x432xbf16> to vector<8x384xbf16>
    %16 = tpu.concatenate %15, %0 in 0 : vector<8x384xbf16>, vector<8x384xbf16> -> vector<16x384xbf16>
    %c64 = arith.constant 64 : index
    %c0_8 = arith.constant 0 : index
    %17 = vector.load %arg5[%c64, %c0_8] : memref<144x384xbf16, #tpu.memory_space<vmem>>, vector<16x384xbf16>
    tpu.vector_store %arg5[%c64, %c0_8], %16 {strides = array<i32>} : memref<144x384xbf16, #tpu.memory_space<vmem>>, vector<16x384xbf16>,
    %18 = vector.extract_strided_slice %2 {offsets = [0, 20], sizes = [8, 384], strides = [1, 1]} : vector<8x432xbf16> to vector<8x384xbf16>
    %19 = tpu.concatenate %18, %0 in 0 : vector<8x384xbf16>, vector<8x384xbf16> -> vector<16x384xbf16>
    %c80 = arith.constant 80 : index
    %c0_9 = arith.constant 0 : index
    %20 = vector.load %arg5[%c80, %c0_9] : memref<144x384xbf16, #tpu.memory_space<vmem>>, vector<16x384xbf16>
    tpu.vector_store %arg5[%c80, %c0_9], %19 {strides = array<i32>} : memref<144x384xbf16, #tpu.memory_space<vmem>>, vector<16x384xbf16>,
    %21 = vector.extract_strided_slice %2 {offsets = [0, 36], sizes = [8, 384], strides = [1, 1]} : vector<8x432xbf16> to vector<8x384xbf16>
    %22 = tpu.concatenate %21, %0 in 0 : vector<8x384xbf16>, vector<8x384xbf16> -> vector<16x384xbf16>
    %c96 = arith.constant 96 : index
    %c0_10 = arith.constant 0 : index
    %23 = vector.load %arg5[%c96, %c0_10] : memref<144x384xbf16, #tpu.memory_space<vmem>>, vector<16x384xbf16>
    tpu.vector_store %arg5[%c96, %c0_10], %22 {strides = array<i32>} : memref<144x384xbf16, #tpu.memory_space<vmem>>, vector<16x384xbf16>,
    %24 = vector.extract_strided_slice %2 {offsets = [0, 37], sizes = [8, 384], strides = [1, 1]} : vector<8x432xbf16> to vector<8x384xbf16>
    %25 = tpu.concatenate %24, %0 in 0 : vector<8x384xbf16>, vector<8x384xbf16> -> vector<16x384xbf16>
    %c112 = arith.constant 112 : index
    %c0_11 = arith.constant 0 : index
    %26 = vector.load %arg5[%c112, %c0_11] : memref<144x384xbf16, #tpu.memory_space<vmem>>, vector<16x384xbf16>
    tpu.vector_store %arg5[%c112, %c0_11], %25 {strides = array<i32>} : memref<144x384xbf16, #tpu.memory_space<vmem>>, vector<16x384xbf16>,
    %27 = vector.extract_strided_slice %2 {offsets = [0, 38], sizes = [8, 384], strides = [1, 1]} : vector<8x432xbf16> to vector<8x384xbf16>
    %28 = tpu.concatenate %27, %0 in 0 : vector<8x384xbf16>, vector<8x384xbf16> -> vector<16x384xbf16>
    %c128 = arith.constant 128 : index
    %c0_12 = arith.constant 0 : index
    %29 = vector.load %arg5[%c128, %c0_12] : memref<144x384xbf16, #tpu.memory_space<vmem>>, vector<16x384xbf16>
    tpu.vector_store %arg5[%c128, %c0_12], %28 {strides = array<i32>} : memref<144x384xbf16, #tpu.memory_space<vmem>>, vector<16x384xbf16>,
    %c0_13 = arith.constant 0 : index
    %c0_14 = arith.constant 0 : index
    %30 = vector.load %arg2[%c0_13, %c0_14] : memref<16x144xbf16, #tpu.memory_space<vmem>>, vector<16x144xbf16>
    %c0_15 = arith.constant 0 : index
    %c0_16 = arith.constant 0 : index
    %31 = vector.load %arg5[%c0_15, %c0_16] : memref<144x384xbf16, #tpu.memory_space<vmem>>, vector<144x384xbf16>
    %cst_17 = arith.constant dense<0.000000e+00> : vector<16x384xf32>
    %32 = tpu.matmul %30, %31, %cst_17 {dimension_numbers = #tpu.dot_dimension_numbers<[1], [0], [0], [1], [0, 0, 1, 1], [], []>} : vector<16x144xbf16>, vector<144x384xbf16>, vector<16x384xf32> -> vector<16x384xf32>
    %c0_18 = arith.constant 0 : index
    %c0_19 = arith.constant 0 : index
    %c0_20 = arith.constant 0 : index
    %33 = vector.load %arg3[%c0_18, %c0_19, %c0_20] : memref<2x16x1xf32, #tpu.memory_space<vmem>>, vector<1x16x1xf32>
    %34 = vector.shape_cast %33 : vector<1x16x1xf32> to vector<16x1xf32>
    %35 = vector.broadcast %34 : vector<16x1xf32> to vector<16x384xf32>
    %36 = arith.mulf %32, %35 : vector<16x384xf32>
    %c1 = arith.constant 1 : index
    %c0_21 = arith.constant 0 : index
    %c0_22 = arith.constant 0 : index
    %37 = vector.load %arg3[%c1, %c0_21, %c0_22] : memref<2x16x1xf32, #tpu.memory_space<vmem>>, vector<1x16x1xf32>
    %38 = vector.shape_cast %37 : vector<1x16x1xf32> to vector<16x1xf32>
    %39 = vector.broadcast %38 : vector<16x1xf32> to vector<16x384xf32>
    %40 = arith.addf %36, %39 : vector<16x384xf32>
    %cst_23 = arith.constant 0.000000e+00 : f32
    %41 = vector.broadcast %cst_23 : f32 to vector<16x384xf32>
    %42 = arith.maximumf %40, %41 : vector<16x384xf32>
    %43 = vector.extract_strided_slice %42 {offsets = [0, 0], sizes = [8, 384], strides = [1, 1]} : vector<16x384xf32> to vector<8x384xf32>
    %44 = vector.extract_strided_slice %42 {offsets = [8, 0], sizes = [8, 384], strides = [1, 1]} : vector<16x384xf32> to vector<8x384xf32>
    %45 = arith.addf %43, %44 : vector<8x384xf32>
    %c0_24 = arith.constant 0 : index
    %c0_25 = arith.constant 0 : index
    %c0_26 = arith.constant 0 : index
    %46 = vector.load %arg4[%c0_24, %c0_25, %c0_26] : memref<1x8x384xf32, #tpu.memory_space<vmem>>, vector<1x8x384xf32>
    %47 = vector.shape_cast %46 : vector<1x8x384xf32> to vector<8x384xf32>
    %48 = vector.shape_cast %45 : vector<8x384xf32> to vector<1x8x384xf32>
    tpu.vector_store %arg4[%c0_24, %c0_25, %c0_26], %48 {strides = array<i32>} : memref<1x8x384xf32, #tpu.memory_space<vmem>>, vector<1x8x384xf32>,
    return
  }
  func.func @transform_0(%arg0: i32) -> (i32, i32, i32, i32) {
    %c0_i32 = arith.constant 0 : i32
    %c0_i32_0 = arith.constant 0 : i32
    %c0_i32_1 = arith.constant 0 : i32
    %c0_i32_2 = arith.constant 0 : i32
    return %arg0, %c0_i32, %c0_i32_0, %c0_i32_1 : i32, i32, i32, i32
  }
  func.func @transform_1(%arg0: i32) -> (i32, i32) {
    %c0_i32 = arith.constant 0 : i32
    %c0_i32_0 = arith.constant 0 : i32
    %c0_i32_1 = arith.constant 0 : i32
    return %c0_i32, %c0_i32_0 : i32, i32
  }
  func.func @transform_2(%arg0: i32) -> (i32, i32, i32) {
    %c0_i32 = arith.constant 0 : i32
    %c0_i32_0 = arith.constant 0 : i32
    %c0_i32_1 = arith.constant 0 : i32
    %c0_i32_2 = arith.constant 0 : i32
    return %c0_i32, %c0_i32_0, %c0_i32_1 : i32, i32, i32
  }
  func.func @transform_3(%arg0: i32) -> (i32, i32, i32) {
    %c0_i32 = arith.constant 0 : i32
    %c0_i32_0 = arith.constant 0 : i32
    %c0_i32_1 = arith.constant 0 : i32
    return %arg0, %c0_i32, %c0_i32_0 : i32, i32, i32
  }
}

</mosaic_0001>

<llo_original>
// kernel: tpu_custom_call.1
$region0: #{tpu_custom_call.1}
  #allocation0 [shape = 'u32[]', space=smem, size = 0x4, offset = 0x4, fixed_abs, tag = 'smem constant byte address 0x4 - core index']
  #allocation1 [shape = 'u32[144,128]{1,0:T(1,128)}', space=vmem, size = 0x12000, scoped, tag = 'internal scratch']
  #allocation2 [shape = 'bf16[144,384]{1,0:T(16,128)(2,1)}', space=vmem, size = 0x1b000, scoped, tag = 'scratch operand']
  %s0 = inlined_call_operand.vmem [shape: bf16[2,1,8,432], index: 0, kind: input, shape index: {}]
  %s1 = inlined_call_operand.hbm [shape: bf16[16,144], index: 1, kind: input, shape index: {}]
  %s2 = inlined_call_operand.vmem [shape: f32[2,16,1], index: 2, kind: input, shape index: {}]
  %s3 = inlined_call_operand.hbm [shape: f32[2,8,384], index: 3, kind: output, shape index: {}]
  %s4 = sld [smem:[#allocation0]]
  $region49: #{tpu_custom_call.1} parent=0
    _
  %s6 = ssub.s32 1, %s4
  %s7 = scalar_select 0, %s6, %s4
  $region1: #{tpu_custom_call.1} parent=0
    #allocation3 [shape = 'u8[8192]{0}', space=vmem, size = 0x2000, scoped, tag = 'input window, operand 1, single buffered']
    #allocation4 [shape = 's32[2]{0}', space=sflag, size = 0x8, scoped, tag = 'scoped memory for tpu_custom_call.1']
    #allocation5 [shape = 's32[2]{0}', space=sflag, size = 0x8, scoped, tag = 'scoped memory for tpu_custom_call.1']
    #allocation6 [shape = 'u8[24576]{0}', space=vmem, size = 0x6000, scoped, tag = 'output window, operand 0']
    %8 = vsyncpa [#allocation4], 0
    %9 = vsyncpa [#allocation5], 0
    %s10 = scalar_lea.sflag [#allocation5], 1
    %11 = vsyncpa %s10, 0
    loop: start=0, step=1, limit=4
    $region2: #{tpu_custom_call.1} parent=1 // loop_pre_header
      _
    $region3: #{tpu_custom_call.1} parent=1 // loop_header
      %s13 = sphi 0, %s17
      %p14 = scmp.ge.s32.totalorder %s13, 4
      %s23 = sphi 0, %s25
      %s26 = sphi 0, %s23
      %s27 = sphi 0, %s26
      %s43 = sphi 0, %s27
      %s47 = sphi 0, %s47
      %s49 = sphi 0, %s47
      %s50 = sphi 0, %s49
      %s64 = sphi 0, %s50
      %s68 = sphi 0, %s68
      %s70 = sphi 0, %s68
      %s71 = sphi 0, %s70
      %s85 = sphi 0, %s71
      %s91 = sphi 0, %s93
      %s94 = sphi 0, %s91
      %s95 = sphi 0, %s94
      %s111 = sphi 0, %s95
    $region4: #{tpu_custom_call.1} parent=1 // loop_header_branch
      %16 = sbr.rel (%p14) target = $region8
    $region5: #{tpu_custom_call.1} parent=1 // loop_body
      %s18 = ssub.s32 %s13, 1
      %s19 = ssub.s32 %s13, 2
      %s20 = sadd.s32 %s13, 1
      %s21 = ssub.s32 %s13, %s20
      %p22 = scmp.eq.s32.totalorder %s21, 0
      %s24 = sadd.s32 %s23, 1
      %s25 = scalar_select %p22, %s23, %s24
      %p28 = pneg %p22
      %p29 = scmp.eq.s32.totalorder %s13, 1
      %p30 = por %p28, %p29
      %p31 = scmp.ne.s32.totalorder %s23, %s26
      %p32 = scmp.eq.s32.totalorder %s13, 0
      %p33 = por %p31, %p32
      %p34 = scmp.ne.s32.totalorder %s23, %s26
      %p35 = scmp.eq.s32.totalorder %s18, 1
      %p36 = por %p34, %p35
      %p37 = scmp.ne.s32.totalorder %s26, %s27
      %p38 = scmp.eq.s32.totalorder %s18, 0
      %p39 = por %p37, %p38
      %p40 = scmp.ne.s32.totalorder %s26, %s27
      %p41 = scmp.eq.s32.totalorder %s19, 1
      %p42 = por %p40, %p41
      %p44 = scmp.ne.s32.totalorder %s27, %s43
      %p45 = scmp.eq.s32.totalorder %s19, 0
      %p46 = por %p44, %p45
      %s48 = sadd.s32 %s47, 1
      %p51 = scmp.eq.s32.totalorder %s13, 1
      %p52 = scmp.ne.s32.totalorder %s47, %s49
      %p53 = scmp.eq.s32.totalorder %s13, 0
      %p54 = por %p52, %p53
      %p55 = scmp.ne.s32.totalorder %s47, %s49
      %p56 = scmp.eq.s32.totalorder %s18, 1
      %p57 = por %p55, %p56
      %p58 = scmp.ne.s32.totalorder %s49, %s50
      %p59 = scmp.eq.s32.totalorder %s18, 0
      %p60 = por %p58, %p59
      %p61 = scmp.ne.s32.totalorder %s49, %s50
      %p62 = scmp.eq.s32.totalorder %s19, 1
      %p63 = por %p61, %p62
      %p65 = scmp.ne.s32.totalorder %s50, %s64
      %p66 = scmp.eq.s32.totalorder %s19, 0
      %p67 = por %p65, %p66
      %s69 = sadd.s32 %s68, 1
      %p72 = scmp.eq.s32.totalorder %s13, 1
      %p73 = scmp.ne.s32.totalorder %s68, %s70
      %p74 = scmp.eq.s32.totalorder %s13, 0
      %p75 = por %p73, %p74
      %p76 = scmp.ne.s32.totalorder %s68, %s70
      %p77 = scmp.eq.s32.totalorder %s18, 1
      %p78 = por %p76, %p77
      %p79 = scmp.ne.s32.totalorder %s70, %s71
      %p80 = scmp.eq.s32.totalorder %s18, 0
      %p81 = por %p79, %p80
      %p82 = scmp.ne.s32.totalorder %s70, %s71
      %p83 = scmp.eq.s32.totalorder %s19, 1
      %p84 = por %p82, %p83
      %p86 = scmp.ne.s32.totalorder %s71, %s85
      %p87 = scmp.eq.s32.totalorder %s19, 0
      %p88 = por %p86, %p87
      %s89 = ssub.s32 %s13, %s20
      %p90 = scmp.eq.s32.totalorder %s89, 0
      %s92 = sadd.s32 %s91, 1
      %s93 = scalar_select %p90, %s91, %s92
      %p96 = pneg %p90
      %p97 = scmp.eq.s32.totalorder %s13, 1
      %p98 = por %p96, %p97
      %p99 = scmp.ne.s32.totalorder %s91, %s94
      %p100 = scmp.eq.s32.totalorder %s13, 0
      %p101 = por %p99, %p100
      %p102 = scmp.ne.s32.totalorder %s91, %s94
      %p103 = scmp.eq.s32.totalorder %s18, 1
      %p104 = por %p102, %p103
      %p105 = scmp.ne.s32.totalorder %s94, %s95
      %p106 = scmp.eq.s32.totalorder %s18, 0
      %p107 = por %p105, %p106
      %p108 = scmp.ne.s32.totalorder %s94, %s95
      %p109 = scmp.eq.s32.totalorder %s19, 1
      %p110 = por %p108, %p109
      %p112 = scmp.ne.s32.totalorder %s95, %s111
      %p113 = scmp.eq.s32.totalorder %s19, 0
      %p114 = por %p112, %p113
      %p115 = scmp.le.s32.totalorder 1, %s13
      %p116 = scmp.lt.s32.totalorder %s13, 3
      %p117 = pnand %p115, %p116
      %p118 = pneg %p117
      // Predicated region
      $region9: #{tpu_custom_call.1} parent=5 // pred_check
        _
      $region10: #{tpu_custom_call.1} parent=5 // pred_check_branch
        %120 = sbr.rel (%p117) target = $region12
      $region11: #{tpu_custom_call.1} parent=5 // pred_region
        %s121 = ssub.s32 %s13, 1
        // Predicated region
        $region13: #{tpu_custom_call.1} parent=11 // pred_check
          %p122 = pneg %p60
        $region14: #{tpu_custom_call.1} parent=11 // pred_check_branch
          %124 = sbr.rel (%p122) target = $region16
        $region15: #{tpu_custom_call.1} parent=11 // pred_region
          %s126 = ssub.s32 256, 256
          %127 = vsyncadd [#allocation4], %s126
          %s128 = sshll.u32 [#allocation3], 4
          %s129 = int_to_ptr.vmem [resolvable:$true] %s128
          %134 = dma.hbm_to_vmem [thread:$0]  %s1, 256, %s129, [#allocation4], 128, 128, 8
        $region16: #{tpu_custom_call.1} parent=11 // pred_fallthru
          _
        // Predicated region
        $region17: #{tpu_custom_call.1} parent=11 // pred_check
          %p135 = pneg %p81
        $region18: #{tpu_custom_call.1} parent=11 // pred_check_branch
          %137 = sbr.rel (%p135) target = $region20
        $region19: #{tpu_custom_call.1} parent=11 // pred_region
          _
        $region20: #{tpu_custom_call.1} parent=11 // pred_fallthru
          _
      $region12: #{tpu_custom_call.1} parent=5 // pred_fallthru
        _
      %p138 = scmp.lt.s32.totalorder %s13, 2
      // Predicated region
      $region21: #{tpu_custom_call.1} parent=5 // pred_check
        %p139 = pneg %p138
      $region22: #{tpu_custom_call.1} parent=5 // pred_check_branch
        %141 = sbr.rel (%p139) target = $region24
      $region23: #{tpu_custom_call.1} parent=5 // pred_region
        // Predicated region
        $region25: #{tpu_custom_call.1} parent=23 // pred_check
          %p142 = pneg %p33
        $region26: #{tpu_custom_call.1} parent=23 // pred_check_branch
          %144 = sbr.rel (%p142) target = $region28
        $region27: #{tpu_custom_call.1} parent=23 // pred_region
          %p145 = scmp.lt.s32.totalorder %s13, 1
          %s146 = scalar_select %p145, %s13, 1
          %s147 = smul.addr %s146, 4
          %s148 = smul.addr %s147, 4
          %s149 = scalar_lea.vmem %s0, %s148
        $region28: #{tpu_custom_call.1} parent=23 // pred_fallthru
          _
      $region24: #{tpu_custom_call.1} parent=5 // pred_fallthru
        _
      %p150 = scmp.le.s32.totalorder 1, %s13
      %p151 = scmp.lt.s32.totalorder %s13, 3
      %p152 = pnand %p150, %p151
      %p153 = pneg %p152
      // Predicated region
      $region29: #{tpu_custom_call.1} parent=5 // pred_check
        _
      $region30: #{tpu_custom_call.1} parent=5 // pred_check_branch
        %155 = sbr.rel (%p152) target = $region32
      $region31: #{tpu_custom_call.1} parent=5 // pred_region
        %s156 = ssub.s32 %s13, 1
        // Predicated region
        $region33: #{tpu_custom_call.1} parent=31 // pred_check
          %p157 = pneg %p60
        $region34: #{tpu_custom_call.1} parent=31 // pred_check_branch
          %159 = sbr.rel (%p157) target = $region36
        $region35: #{tpu_custom_call.1} parent=31 // pred_region
          %160 = dma.done [#allocation4], 256
        $region36: #{tpu_custom_call.1} parent=31 // pred_fallthru
          _
        %p161 = scmp.lt.s32.totalorder %s18, 1
        %s162 = scalar_select %p161, %s18, 1
        %s163 = smul.addr %s162, 4
        %s164 = smul.addr %s163, 4
        %s165 = scalar_lea.vmem %s0, %s164
        %p166 = pneg %p39
        %p167 = pneg %p36
        %p168 = pneg %p60
        %p169 = pneg %p57
        %p170 = pneg %p81
        %p171 = pneg %p78
        %p172 = pneg %p107
        %p173 = pneg %p104
        %s174 = sand.u32 %s94, 1
        %s175 = scalar_lea.sflag [#allocation5], %s174
        %s176 = sand.u32 %s94, 1
        %s177 = smul.addr %s176, 24
        %s178 = scalar_lea.vmem [#allocation6], %s177
        %p179 = scmp.lt.s32.totalorder %s18, 1
        %s180 = scalar_select %p179, %s18, 1
        %s181 = smul.addr %s180, 4
        %s182 = smul.addr %s181, 4
        %s183 = scalar_lea.vmem %s0, %s182
        %v185 = vld [vmem:[%s183] sm:$0xff]
        %v186 = vld [vmem:[%s183 + $0x8] sm:$0xff]
        %v189 = vunpack.c.l.b16 %v185
        %v190 = vunpack.c.h.b16 %v185
        %v191 = vunpack.c.l.b16 %v186
        %v192 = vpack.c.b16 %v189, %v189
        %v193 = vpack.c.b16 %v190, %v190
        %v194 = vpack.c.b16 %v191, %v191
        %vm195 = vcmask 1043456
        %v198 = vsel %vm195, %v192, 0
        %v201 = vsel %vm195, %v193, 0
        %v204 = vsel %vm195, %v194, 0
        %206 = vst [vmem:[#allocation2] sm:$0xff] %v198
        %207 = vst [vmem:[#allocation2 + $0x8] sm:$0xff] %v201
        %208 = vst [vmem:[#allocation2 + $0x10] sm:$0xff] %v204
        %v209 = vunpack.c.h.b16 %v186
        %v210 = vpack.c.b16 %v209, %v209
        %v212 = vsel %vm195, %v210, 0
        %217 = vrot.lane.b32.xlu0 %v198, 127
        %v218 = vpop.permute.xlu0 %217
        %219 = vrot.lane.b32.xlu0 %v201, 127
        %v220 = vpop.permute.xlu0 %219
        %221 = vrot.lane.b32.xlu0 %v204, 127
        %v222 = vpop.permute.xlu0 %221
        %223 = vrot.lane.b32.xlu0 %v212, 127
        %v224 = vpop.permute.xlu0 %223
        %vm225 = vcmask 1039360
        %v226 = vsel %vm225, %v218, %v220
        %v227 = vsel %vm225, %v220, %v222
        %v228 = vsel %vm225, %v222, %v224
        %232 = vst [vmem:[#allocation2 + $0x18] sm:$0xff] %v226
        %233 = vst [vmem:[#allocation2 + $0x20] sm:$0xff] %v227
        %234 = vst [vmem:[#allocation2 + $0x28] sm:$0xff] %v228
        %235 = vrot.lane.b32.xlu0 %v198, 126
        %v236 = vpop.permute.xlu0 %235
        %237 = vrot.lane.b32.xlu0 %v201, 126
        %v238 = vpop.permute.xlu0 %237
        %239 = vrot.lane.b32.xlu0 %v204, 126
        %v240 = vpop.permute.xlu0 %239
        %241 = vrot.lane.b32.xlu0 %v212, 126
        %v242 = vpop.permute.xlu0 %241
        %vm243 = vcmask 1031168
        %v244 = vsel %vm243, %v236, %v238
        %v245 = vsel %vm243, %v238, %v240
        %v246 = vsel %vm243, %v240, %v242
        %250 = vst [vmem:[#allocation2 + $0x30] sm:$0xff] %v244
        %251 = vst [vmem:[#allocation2 + $0x38] sm:$0xff] %v245
        %252 = vst [vmem:[#allocation2 + $0x40] sm:$0xff] %v246
        %253 = vrot.lane.b32.xlu0 %v198, 110
        %v254 = vpop.permute.xlu0 %253
        %255 = vrot.lane.b32.xlu0 %v201, 110
        %v256 = vpop.permute.xlu0 %255
        %257 = vrot.lane.b32.xlu0 %v204, 110
        %v258 = vpop.permute.xlu0 %257
        %259 = vrot.lane.b32.xlu0 %v212, 110
        %v260 = vpop.permute.xlu0 %259
        %vm261 = vcmask 900096
        %v262 = vsel %vm261, %v254, %v256
        %v263 = vsel %vm261, %v256, %v258
        %v264 = vsel %vm261, %v258, %v260
        %268 = vst [vmem:[#allocation2 + $0x48] sm:$0xff] %v262
        %269 = vst [vmem:[#allocation2 + $0x50] sm:$0xff] %v263
        %270 = vst [vmem:[#allocation2 + $0x58] sm:$0xff] %v264
        %271 = vrot.lane.b32.xlu0 %v198, 109
        %v272 = vpop.permute.xlu0 %271
        %273 = vrot.lane.b32.xlu0 %v201, 109
        %v274 = vpop.permute.xlu0 %273
        %275 = vrot.lane.b32.xlu0 %v204, 109
        %v276 = vpop.permute.xlu0 %275
        %277 = vrot.lane.b32.xlu0 %v212, 109
        %v278 = vpop.permute.xlu0 %277
        %vm279 = vcmask 891904
        %v280 = vsel %vm279, %v272, %v274
        %v281 = vsel %vm279, %v274, %v276
        %v282 = vsel %vm279, %v276, %v278
        %286 = vst [vmem:[#allocation2 + $0x60] sm:$0xff] %v280
        %287 = vst [vmem:[#allocation2 + $0x68] sm:$0xff] %v281
        %288 = vst [vmem:[#allocation2 + $0x70] sm:$0xff] %v282
        %289 = vrot.lane.b32.xlu0 %v198, 108
        %v290 = vpop.permute.xlu0 %289
        %291 = vrot.lane.b32.xlu0 %v201, 108
        %v292 = vpop.permute.xlu0 %291
        %293 = vrot.lane.b32.xlu0 %v204, 108
        %v294 = vpop.permute.xlu0 %293
        %295 = vrot.lane.b32.xlu0 %v212, 108
        %v296 = vpop.permute.xlu0 %295
        %vm297 = vcmask 883712
        %v298 = vsel %vm297, %v290, %v292
        %v299 = vsel %vm297, %v292, %v294
        %v300 = vsel %vm297, %v294, %v296
        %304 = vst [vmem:[#allocation2 + $0x78] sm:$0xff] %v298
        %305 = vst [vmem:[#allocation2 + $0x80] sm:$0xff] %v299
        %306 = vst [vmem:[#allocation2 + $0x88] sm:$0xff] %v300
        %307 = vrot.lane.b32.xlu0 %v198, 92
        %v308 = vpop.permute.xlu0 %307
        %309 = vrot.lane.b32.xlu0 %v201, 92
        %v310 = vpop.permute.xlu0 %309
        %311 = vrot.lane.b32.xlu0 %v204, 92
        %v312 = vpop.permute.xlu0 %311
        %313 = vrot.lane.b32.xlu0 %v212, 92
        %v314 = vpop.permute.xlu0 %313
        %vm315 = vcmask 752640
        %v316 = vsel %vm315, %v308, %v310
        %v317 = vsel %vm315, %v310, %v312
        %v318 = vsel %vm315, %v312, %v314
        %322 = vst [vmem:[#allocation2 + $0x90] sm:$0xff] %v316
        %323 = vst [vmem:[#allocation2 + $0x98] sm:$0xff] %v317
        %324 = vst [vmem:[#allocation2 + $0xa0] sm:$0xff] %v318
        %325 = vrot.lane.b32.xlu0 %v198, 91
        %v326 = vpop.permute.xlu0 %325
        %327 = vrot.lane.b32.xlu0 %v201, 91
        %v328 = vpop.permute.xlu0 %327
        %329 = vrot.lane.b32.xlu0 %v204, 91
        %v330 = vpop.permute.xlu0 %329
        %331 = vrot.lane.b32.xlu0 %v212, 91
        %v332 = vpop.permute.xlu0 %331
        %vm333 = vcmask 744448
        %v334 = vsel %vm333, %v326, %v328
        %v335 = vsel %vm333, %v328, %v330
        %v336 = vsel %vm333, %v330, %v332
        %340 = vst [vmem:[#allocation2 + $0xa8] sm:$0xff] %v334
        %341 = vst [vmem:[#allocation2 + $0xb0] sm:$0xff] %v335
        %342 = vst [vmem:[#allocation2 + $0xb8] sm:$0xff] %v336
        %343 = vrot.lane.b32.xlu0 %v198, 90
        %v344 = vpop.permute.xlu0 %343
        %345 = vrot.lane.b32.xlu0 %v201, 90
        %v346 = vpop.permute.xlu0 %345
        %347 = vrot.lane.b32.xlu0 %v204, 90
        %v348 = vpop.permute.xlu0 %347
        %349 = vrot.lane.b32.xlu0 %v212, 90
        %v350 = vpop.permute.xlu0 %349
        %vm351 = vcmask 736256
        %v352 = vsel %vm351, %v344, %v346
        %v353 = vsel %vm351, %v346, %v348
        %v354 = vsel %vm351, %v348, %v350
        %358 = vst [vmem:[#allocation2 + $0xc0] sm:$0xff] %v352
        %359 = vst [vmem:[#allocation2 + $0xc8] sm:$0xff] %v353
        %360 = vst [vmem:[#allocation2 + $0xd0] sm:$0xff] %v354
        %v361 = vld [vmem:[#allocation3] sm:$0xff]
        %v362 = vld [vmem:[#allocation3 + $0x8] sm:$0xff]
        %v363 = vld [vmem:[#allocation2] sm:$0xff]
        %v364 = vld [vmem:[#allocation2 + $0x8] sm:$0xff]
        %v365 = vld [vmem:[#allocation2 + $0x10] sm:$0xff]
        %v366 = vld [vmem:[#allocation2 + $0x18] sm:$0xff]
        %v367 = vld [vmem:[#allocation2 + $0x20] sm:$0xff]
        %v368 = vld [vmem:[#allocation2 + $0x28] sm:$0xff]
        %v369 = vld [vmem:[#allocation2 + $0x30] sm:$0xff]
        %v370 = vld [vmem:[#allocation2 + $0x38] sm:$0xff]
        %v371 = vld [vmem:[#allocation2 + $0x40] sm:$0xff]
        %v372 = vld [vmem:[#allocation2 + $0x48] sm:$0xff]
        %v373 = vld [vmem:[#allocation2 + $0x50] sm:$0xff]
        %v374 = vld [vmem:[#allocation2 + $0x58] sm:$0xff]
        %v375 = vld [vmem:[#allocation2 + $0x60] sm:$0xff]
        %v376 = vld [vmem:[#allocation2 + $0x68] sm:$0xff]
        %v377 = vld [vmem:[#allocation2 + $0x70] sm:$0xff]
        %v378 = vld [vmem:[#allocation2 + $0x78] sm:$0xff]
        %v379 = vld [vmem:[#allocation2 + $0x80] sm:$0xff]
        %v380 = vld [vmem:[#allocation2 + $0x88] sm:$0xff]
        %v381 = vld [vmem:[#allocation2 + $0x90] sm:$0xff]
        %v382 = vld [vmem:[#allocation2 + $0x98] sm:$0xff]
        %v383 = vld [vmem:[#allocation2 + $0xa0] sm:$0xff]
        %v384 = vld [vmem:[#allocation2 + $0xa8] sm:$0xff]
        %v385 = vld [vmem:[#allocation2 + $0xb0] sm:$0xff]
        %v386 = vld [vmem:[#allocation2 + $0xb8] sm:$0xff]
        %v387 = vld [vmem:[#allocation2 + $0xc0] sm:$0xff]
        %v388 = vld [vmem:[#allocation2 + $0xc8] sm:$0xff]
        %v389 = vld [vmem:[#allocation2 + $0xd0] sm:$0xff]
        %v392 = vunpack.c.l.b16 %v361
        %v393 = vunpack.c.h.b16 %v361
        %v394 = vunpack.c.l.b16 %v362
        %v395 = vunpack.c.h.b16 %v362
        %v396 = vpack.c.b16 %v394, %v392
        %v397 = vpack.c.b16 %v395, %v393
        %vm399 = vcmask 130048
        %v401 = vsel %vm399, %v397, 0
        %403 = vmatprep.subr.bf16.mxu0 %v364
        %404 = vmatpush1.bf16.msra.mxu0 %v363
        %405 = vmatprep.subr.bf16.mxu0 %v367
        %406 = vmatpush1.bf16.msra.mxu0 %v366
        %407 = vmatprep.subr.bf16.mxu0 %v370
        %408 = vmatpush1.bf16.msra.mxu0 %v369
        %409 = vmatprep.subr.bf16.mxu0 %v373
        %410 = vmatpush1.bf16.msra.mxu0 %v372
        %411 = vmatprep.subr.bf16.mxu0 %v376
        %412 = vmatpush1.bf16.msra.mxu0 %v375
        %413 = vmatprep.subr.bf16.mxu0 %v379
        %414 = vmatpush1.bf16.msra.mxu0 %v378
        %415 = vmatprep.subr.bf16.mxu0 %v382
        %416 = vmatpush1.bf16.msra.mxu0 %v381
        %417 = vmatprep.subr.bf16.mxu0 %v385
        %418 = vmatpush1.bf16.msra.mxu0 %v384
        %419 = vmatprep.subr.bf16.mxu0 %v388
        %420 = vmatpush1.bf16.msra.mxu0 %v387
        %421 = vmatprep.subr.bf16.mxu0 0
        %422 = vmatpush1.bf16.msra.mxu0 0
        %423 = vmatprep.subr.bf16.mxu0 0
        %424 = vmatpush1.bf16.msra.mxu0 0
        %425 = vmatprep.subr.bf16.mxu0 0
        %426 = vmatpush1.bf16.msra.mxu0 0
        %427 = vmatprep.subr.bf16.mxu0 0
        %428 = vmatpush1.bf16.msra.mxu0 0
        %429 = vmatprep.subr.bf16.mxu0 0
        %430 = vmatpush1.bf16.msra.mxu0 0
        %431 = vmatprep.subr.bf16.mxu0 0
        %432 = vmatpush1.bf16.msra.mxu0 0
        %433 = vmatprep.subr.bf16.mxu0 0
        %434 = vmatpush1.bf16.msra.mxu0 0
        %435 = vmatprep.mubr.bf16.mxu0 %v401
        %436 = vmatmul.mubr.bf16.gmra.mrb[0].mxu0 %v396
        %v437 = vpop.f32.mrb[0].mxu0
        %v438 = vadd.f32 0.0, %v437
        %v439 = vpop.f32.mrb[0].mxu0
        %v440 = vadd.f32 0.0, %v439
        %v441 = vpop.f32.mrb[0].mxu0
        %v442 = vadd.f32 0.0, %v441
        %v443 = vpop.f32.mrb[0].mxu0
        %v444 = vadd.f32 0.0, %v443
        %445 = vdwg.mxu0
        %446 = vmatprep.subr.bf16.mxu0 0
        %447 = vmatpush1.bf16.msra.mxu0 %v365
        %448 = vmatprep.subr.bf16.mxu0 0
        %449 = vmatpush1.bf16.msra.mxu0 %v368
        %450 = vmatprep.subr.bf16.mxu0 0
        %451 = vmatpush1.bf16.msra.mxu0 %v371
        %452 = vmatprep.subr.bf16.mxu0 0
        %453 = vmatpush1.bf16.msra.mxu0 %v374
        %454 = vmatprep.subr.bf16.mxu0 0
        %455 = vmatpush1.bf16.msra.mxu0 %v377
        %456 = vmatprep.subr.bf16.mxu0 0
        %457 = vmatpush1.bf16.msra.mxu0 %v380
        %458 = vmatprep.subr.bf16.mxu0 0
        %459 = vmatpush1.bf16.msra.mxu0 %v383
        %460 = vmatprep.subr.bf16.mxu0 0
        %461 = vmatpush1.bf16.msra.mxu0 %v386
        %462 = vmatprep.subr.bf16.mxu0 0
        %463 = vmatpush1.bf16.msra.mxu0 %v389
        %464 = vmatprep.subr.bf16.mxu0 0
        %465 = vmatpush1.bf16.msra.mxu0 0
        %466 = vmatprep.subr.bf16.mxu0 0
        %467 = vmatpush1.bf16.msra.mxu0 0
        %468 = vmatprep.subr.bf16.mxu0 0
        %469 = vmatpush1.bf16.msra.mxu0 0
        %470 = vmatprep.subr.bf16.mxu0 0
        %471 = vmatpush1.bf16.msra.mxu0 0
        %472 = vmatprep.subr.bf16.mxu0 0
        %473 = vmatpush1.bf16.msra.mxu0 0
        %474 = vmatprep.subr.bf16.mxu0 0
        %475 = vmatpush1.bf16.msra.mxu0 0
        %476 = vmatprep.subr.bf16.mxu0 0
        %477 = vmatpush1.bf16.msra.mxu0 0
        %478 = vmatprep.mubr.bf16.mxu0 %v401
        %479 = vmatmul.mubr.bf16.gmra.mrb[0].mxu0 %v396
        %v480 = vpop.f32.mrb[0].mxu0
        %v481 = vadd.f32 0.0, %v480
        %v482 = vpop.f32.mrb[0].mxu0
        %v483 = vpop.f32.mrb[0].mxu0
        %v484 = vadd.f32 0.0, %v483
        %v485 = vpop.f32.mrb[0].mxu0
        %486 = vdwg.mxu0
        %v487 = vld [vmem:[%s2] sm:$0xff]
        %v488 = vld [vmem:[%s2 + $0x8] sm:$0xff]
        %490 = vset.pattern.permute.xlu0 0
        %491 = vperm.xlu0 %490, %v487
        %v492 = vpop.permute.xlu0 %491
        %495 = vset.pattern.permute.xlu0 0
        %496 = vperm.xlu0 %495, %v488
        %v497 = vpop.permute.xlu0 %496
        %v499 = vmul.f32 %v438, %v492
        %v500 = vmul.f32 %v440, %v492
        %v501 = vmul.f32 %v481, %v492
        %v502 = vmul.f32 %v442, %v497
        %v503 = vmul.f32 %v444, %v497
        %v504 = vmul.f32 %v484, %v497
        %s505 = scalar_lea.vmem %s2, 16
        %v506 = vld [vmem:[%s505] sm:$0xff]
        %v507 = vld [vmem:[%s505 + $0x8] sm:$0xff]
        %509 = vset.pattern.permute.xlu0 0
        %510 = vperm.xlu0 %509, %v506
        %v511 = vpop.permute.xlu0 %510
        %514 = vset.pattern.permute.xlu0 0
        %515 = vperm.xlu0 %514, %v507
        %v516 = vpop.permute.xlu0 %515
        %v518 = vadd.f32 %v499, %v511
        %v519 = vadd.f32 %v500, %v511
        %v520 = vadd.f32 %v501, %v511
        %v521 = vadd.f32 %v502, %v516
        %v522 = vadd.f32 %v503, %v516
        %v523 = vadd.f32 %v504, %v516
        %v524 = vmax.f32 %v518, 0.0
        %v525 = vmax.f32 %v519, 0.0
        %v526 = vmax.f32 %v520, 0.0
        %v527 = vmax.f32 %v521, 0.0
        %v528 = vmax.f32 %v522, 0.0
        %v529 = vmax.f32 %v523, 0.0
        %v530 = vadd.f32 %v524, %v527
        %v531 = vadd.f32 %v525, %v528
        %v532 = vadd.f32 %v526, %v529
        %533 = vst [vmem:[%s178] sm:$0xff] %v530
        %534 = vst [vmem:[%s178 + $0x8] sm:$0xff] %v531
        %535 = vst [vmem:[%s178 + $0x10] sm:$0xff] %v532
        %s536 = sand.u32 %s94, 1
        %s537 = scalar_lea.sflag [#allocation5], %s536
        %s538 = sand.u32 %s94, 1
        %s539 = smul.addr %s538, 24
        %s540 = scalar_lea.vmem [#allocation6], %s539
        // Predicated region
        $region37: #{tpu_custom_call.1} parent=31 // pred_check
          %p541 = pneg %p104
        $region38: #{tpu_custom_call.1} parent=31 // pred_check_branch
          %543 = sbr.rel (%p541) target = $region40
        $region39: #{tpu_custom_call.1} parent=31 // pred_region
          %s545 = ssub.s32 384, 384
          %546 = vsyncadd %s537, %s545
          %s547 = smul.addr %s18, 3
          %s548 = smul.addr %s547, 128
          %s549 = scalar_lea.hbm %s3, %s548
          %s551 = sshll.u32 %s540, 4
          %s552 = int_to_ptr.vmem [resolvable:$true] %s551
          %554 = dma.vmem_to_hbm [thread:$0]  %s552, 384, %s549, %s537
        $region40: #{tpu_custom_call.1} parent=31 // pred_fallthru
          _
      $region32: #{tpu_custom_call.1} parent=5 // pred_fallthru
        _
      %p555 = scmp.le.s32.totalorder 2, %s13
      // Predicated region
      $region41: #{tpu_custom_call.1} parent=5 // pred_check
        %p556 = pneg %p555
      $region42: #{tpu_custom_call.1} parent=5 // pred_check_branch
        %558 = sbr.rel (%p556) target = $region44
      $region43: #{tpu_custom_call.1} parent=5 // pred_region
        %s559 = ssub.s32 %s13, 2
        // Predicated region
        $region45: #{tpu_custom_call.1} parent=43 // pred_check
          %p560 = pneg %p110
        $region46: #{tpu_custom_call.1} parent=43 // pred_check_branch
          %562 = sbr.rel (%p560) target = $region48
        $region47: #{tpu_custom_call.1} parent=43 // pred_region
          %s563 = sand.u32 %s95, 1
          %s564 = scalar_lea.sflag [#allocation5], %s563
          %s565 = sand.u32 %s95, 1
          %s566 = smul.addr %s565, 24
          %s567 = scalar_lea.vmem [#allocation6], %s566
          %568 = dma.done %s564, 384
        $region48: #{tpu_custom_call.1} parent=43 // pred_fallthru
          _
      $region44: #{tpu_custom_call.1} parent=5 // pred_fallthru
        _
    $region6: #{tpu_custom_call.1} parent=1 // loop_footer
      %s17 = sadd.s32 1, %s13
    $region7: #{tpu_custom_call.1} parent=1 // loop_footer_branch
      %12 = sbr.rel target = $region3
    $region8: #{tpu_custom_call.1} parent=1 // loop_exit
      _
    %569 = vsyncpa [#allocation4], 1
    %s570 = scalar_lea.sflag [#allocation4], 1
    %571 = vsyncpa %s570, 1
    %572 = vsyncpa [#allocation5], 1
    %s573 = scalar_lea.sflag [#allocation5], 1
    %574 = vsyncpa %s573, 1

</llo_original>
